<compile_context>
chip_gen: v6e
topology: v6e:2x2x1
jax: 0.10.0
libtpu: 0.0.40
codegen_flags: <defaults>
</compile_context>

<pallas_src>
import jax
import jax.numpy as jnp
from jax.experimental import pallas as pl
from jax.experimental.pallas import tpu as pltpu

LN_EPS = 1e-5


def _round_up(x, m):
    return (x + m - 1) // m * m


# ----------------------------------------------------------------------------- kernels
def _sparse_header_kernel_single(x_ref, gamma_ref, beta_ref, w_ref, b_ref, o_ref):
    """Single class tile: W is grid-invariant and fully resident."""
    # x: (tm, F)   gamma/beta: (1, F) f32   w: (F, C)   b: (1, C) f32   o: (tm, C)
    x = x_ref[...].astype(jnp.float32)
    mean = jnp.mean(x, axis=-1, keepdims=True)
    xc = x - mean
    var = jnp.mean(xc * xc, axis=-1, keepdims=True)          # biased, like torch
    y = xc * jax.lax.rsqrt(var + LN_EPS) * gamma_ref[...] + beta_ref[...]
    out = jnp.dot(y.astype(w_ref.dtype), w_ref[...],
                  preferred_element_type=jnp.float32) + b_ref[...]
    o_ref[...] = out.astype(o_ref.dtype)


def _sparse_header_kernel_tiled(x_ref, gamma_ref, beta_ref, w_ref, b_ref, o_ref, y_ref):
    """Class-tiled path: LayerNorm is computed once per row tile (j == 0) into VMEM
    scratch and reused for every class tile."""
    @pl.when(pl.program_id(1) == 0)
    def _():
        x = x_ref[...].astype(jnp.float32)
        mean = jnp.mean(x, axis=-1, keepdims=True)
        xc = x - mean
        var = jnp.mean(xc * xc, axis=-1, keepdims=True)
        y_ref[...] = xc * jax.lax.rsqrt(var + LN_EPS) * gamma_ref[...] + beta_ref[...]

    out = jnp.dot(y_ref[...].astype(w_ref.dtype), w_ref[...],
                  preferred_element_type=jnp.float32) + b_ref[...]
    o_ref[...] = out.astype(o_ref.dtype)


# ----------------------------------------------------------------------------- wrapper
def _max_rows(budget, feature, tn, x_bytes, w_bytes, out_bytes):
    """How many rows (tm) fit the VMEM budget for a class tile of width tn.

    Counts double-buffered pipeline tiles for x / out / W / params AND the in-kernel
    f32 intermediates (upcast x, centered x, LN output / scratch, f32 matmul result).
    """
    fixed = (2 * feature * tn * w_bytes          # W (double-buffered, grid-invariant)
             + 4 * feature * 4                   # gamma + beta (f32, double-buffered)
             + 4 * tn * 4)                       # bias (f32, double-buffered) + slack
    per_row = (2 * feature * x_bytes             # x tile, double-buffered
               + 2 * tn * out_bytes              # out tile, double-buffered
               + 4 * feature * 4                 # f32 intermediates (x, xc, y/scratch)
               + tn * 4)                         # f32 matmul result
    if budget <= fixed:
        return 0
    return (budget - fixed) // per_row


def sparse_header_forward(x, gamma, beta, w, b):
    """x: (..., feature) -> (..., class_num).  Fused LayerNorm + Linear.

    `w` is expected in (feature, class_num) layout (transpose of torch's nn.Linear weight).
    """
    feature = x.shape[-1]
    class_num = w.shape[1]
    lead = x.shape[:-1]
    out_dtype = x.dtype

    x2d = x.reshape(-1, feature)
    n = x2d.shape[0]

    # Grid-invariant params: cast once here (not per grid step inside the kernel).
    gamma2 = gamma.astype(jnp.float32).reshape(1, feature)
    beta2 = beta.astype(jnp.float32).reshape(1, feature)
    b2 = b.astype(jnp.float32).reshape(1, class_num)

    # ---- generation-aware VMEM budget -------------------------------------------------
    try:
        vmem_cap = int(pltpu.get_tpu_info().vmem_capacity_bytes)
    except Exception:
        vmem_cap = 64 * 1024 * 1024
    if vmem_cap >= 100 * 1024 * 1024:            # v5e / v6e: 128 MiB physical VMEM
        budget = 64 * 1024 * 1024
        vmem_limit = 96 * 1024 * 1024
    else:                                        # v7x: 64 MiB per TensorCore
        budget = 20 * 1024 * 1024
        vmem_limit = 32 * 1024 * 1024

    x_bytes = x2d.dtype.itemsize
    w_bytes = w.dtype.itemsize
    out_bytes = jnp.dtype(out_dtype).itemsize

    tm_target = min(1024, _round_up(n, 8))
    tm_floor = min(512, tm_target)

    single_rows = _max_rows(budget, feature, class_num, x_bytes, w_bytes, out_bytes)

    # Class tiling only helps when class_num is actually splittable (> 128) and a
    # resident W would force tm below the floor.
    tiled = (class_num > 128) and (single_rows < tm_floor)

    if not tiled:
        # ---------------- Case A: W resident, no padding anywhere ----------------------
        tn = class_num
        avail = max(8, single_rows)
        tm = min(tm_target, avail)
        tm = (tm // 128) * 128 if tm >= 128 else max(8, (tm // 8) * 8)
        grid = (pl.cdiv(n, tm),)

        out2d = pl.pallas_call(
            _sparse_header_kernel_single,
            out_shape=jax.ShapeDtypeStruct((n, class_num), out_dtype),
            grid_spec=pltpu.PrefetchScalarGridSpec(
                num_scalar_prefetch=0,
                grid=grid,
                in_specs=[
                    pl.BlockSpec((tm, feature), lambda i: (i, 0)),           # x tile
                    pl.BlockSpec((1, feature), lambda i: (0, 0)),            # gamma (f32)
                    pl.BlockSpec((1, feature), lambda i: (0, 0)),            # beta  (f32)
                    pl.BlockSpec((feature, class_num), lambda i: (0, 0)),    # W (resident)
                    pl.BlockSpec((1, class_num), lambda i: (0, 0)),          # bias  (f32)
                ],
                out_specs=pl.BlockSpec((tm, class_num), lambda i: (i, 0)),
            ),
            compiler_params=pltpu.CompilerParams(
                dimension_semantics=("parallel",),
                vmem_limit_bytes=vmem_limit,
            ),
        )(x2d, gamma2, beta2, w, b2)
        return out2d.reshape(*lead, class_num)

    # -------------------- Case B: tile the class axis (large class_num) ----------------
    c_pad = _round_up(class_num, 128)
    # Largest divisor of c_pad (multiple of 128) that still allows tm >= tm_floor.
    tn = 128
    for cand in range(c_pad, 127, -128):
        if c_pad % cand == 0 and _max_rows(budget, feature, cand,
                                           x_bytes, w_bytes, out_bytes) >= tm_floor:
            tn = cand
            break

    avail = max(8, _max_rows(budget, feature, tn, x_bytes, w_bytes, out_bytes))
    tm = min(tm_target, avail)
    tm = (tm // 128) * 128 if tm >= 128 else max(8, (tm // 8) * 8)

    w_p = jnp.pad(w, ((0, 0), (0, c_pad - class_num)))
    b_p = jnp.pad(b2, ((0, 0), (0, c_pad - class_num)))

    grid = (pl.cdiv(n, tm), c_pad // tn)

    out2d = pl.pallas_call(
        _sparse_header_kernel_tiled,
        out_shape=jax.ShapeDtypeStruct((n, c_pad), out_dtype),
        grid_spec=pltpu.PrefetchScalarGridSpec(
            num_scalar_prefetch=0,
            grid=grid,
            in_specs=[
                pl.BlockSpec((tm, feature), lambda i, j: (i, 0)),            # x tile
                pl.BlockSpec((1, feature), lambda i, j: (0, 0)),             # gamma (f32)
                pl.BlockSpec((1, feature), lambda i, j: (0, 0)),             # beta  (f32)
                pl.BlockSpec((feature, tn), lambda i, j: (0, j)),            # W class tile
                pl.BlockSpec((1, tn), lambda i, j: (0, j)),                  # bias  (f32)
            ],
            out_specs=pl.BlockSpec((tm, tn), lambda i, j: (i, j)),
            scratch_shapes=[pltpu.VMEM((tm, feature), jnp.float32)],         # LN output
        ),
        compiler_params=pltpu.CompilerParams(
            dimension_semantics=("parallel", "arbitrary"),
            vmem_limit_bytes=vmem_limit,
        ),
    )(x2d, gamma2, beta2, w_p, b_p)

    if c_pad != class_num:
        out2d = out2d[:, :class_num]
    return out2d.reshape(*lead, class_num)


# ----------------------------------------------------------------------------- test
def _reference(x, gamma, beta, w, b):
    x = x.astype(jnp.float32)
    mean = jnp.mean(x, axis=-1, keepdims=True)
    var = jnp.mean((x - mean) ** 2, axis=-1, keepdims=True)
    xh = (x - mean) / jnp.sqrt(var + LN_EPS)
    return (xh * gamma + beta) @ w + b


if __name__ == "__main__":
    feature = 32
    class_num = 8
    batch, seq = 2, 8   # -> 16 tokens total

    key = jax.random.PRNGKey(0)
    kx, kg, kb, kw, kbias = jax.random.split(key, 5)

    # Deterministic synthetic parameters (shapes match nn.LayerNorm(feature),
    # nn.Linear(feature, class_num)).
    x = jax.random.normal(kx, (batch, seq, feature), dtype=jnp.float32)
    gamma = 1.0 + 0.1 * jax.random.normal(kg, (feature,), dtype=jnp.float32)
    beta = 0.1 * jax.random.normal(kb, (feature,), dtype=jnp.float32)
    # nn.Linear stores weight as (class_num, feature); kernel uses (feature, class_num).
    w_torch_layout = jax.random.normal(kw, (class_num, feature), dtype=jnp.float32) * (feature ** -0.5)
    w = w_torch_layout.T
    b = jax.random.normal(kbias, (class_num,), dtype=jnp.float32) * 0.01

    out = sparse_header_forward(x, gamma, beta, w, b)
    out = jax.block_until_ready(out)

    ref = _reference(x, gamma, beta, w, b)
    assert out.shape == (batch, seq, class_num)
    assert jnp.allclose(out, ref, atol=1e-4, rtol=1e-4), "mismatch vs reference"

    print("KERNEL_OK")
</pallas_src>

<mosaic_0001>
module attributes {stable_mosaic.version = 11 : i64} {
  func.func @_sparse_header_kernel_single(%arg0: i32, %arg1: memref<16x32xf32, #tpu.memory_space<vmem>>, %arg2: memref<1x32xf32, #tpu.memory_space<vmem>>, %arg3: memref<1x32xf32, #tpu.memory_space<vmem>>, %arg4: memref<32x8xf32, #tpu.memory_space<vmem>>, %arg5: memref<1x8xf32, #tpu.memory_space<vmem>>, %arg6: memref<16x8xf32, #tpu.memory_space<vmem>>) attributes {dimension_semantics = [#tpu.dimension_semantics<parallel>], iteration_bounds = array<i64: 1>, scalar_prefetch = 0 : i64, scratch_operands = 0 : i64, tpu.core_type = #tpu.core_type<tc>, window_params = [{transform_indices = @transform_0, window_bounds = array<i64: 16, 32>}, {pipeline_mode = #tpu.pipeline_mode<synchronous>, transform_indices = @transform_1, window_bounds = array<i64: 1, 32>}, {pipeline_mode = #tpu.pipeline_mode<synchronous>, transform_indices = @transform_2, window_bounds = array<i64: 1, 32>}, {pipeline_mode = #tpu.pipeline_mode<synchronous>, transform_indices = @transform_3, window_bounds = array<i64: 32, 8>}, {pipeline_mode = #tpu.pipeline_mode<synchronous>, transform_indices = @transform_4, window_bounds = array<i64: 1, 8>}, {transform_indices = @transform_5, window_bounds = array<i64: 16, 8>}]} {
    %c0 = arith.constant 0 : index
    %c0_0 = arith.constant 0 : index
    %0 = vector.load %arg1[%c0, %c0_0] : memref<16x32xf32, #tpu.memory_space<vmem>>, vector<16x32xf32>
    %cst = arith.constant dense<0.000000e+00> : vector<16xf32>
    %1 = vector.multi_reduction <add>, %0, %cst [1] : vector<16x32xf32> to vector<16xf32>
    %2 = vector.shape_cast %1 : vector<16xf32> to vector<16x1xf32>
    %cst_1 = arith.constant 3.200000e+01 : f32
    %3 = vector.broadcast %cst_1 : f32 to vector<16x1xf32>
    %4 = arith.divf %2, %3 : vector<16x1xf32>
    %5 = vector.broadcast %4 : vector<16x1xf32> to vector<16x32xf32>
    %6 = arith.subf %0, %5 : vector<16x32xf32>
    %7 = arith.mulf %6, %6 : vector<16x32xf32>
    %cst_2 = arith.constant dense<0.000000e+00> : vector<16xf32>
    %8 = vector.multi_reduction <add>, %7, %cst_2 [1] : vector<16x32xf32> to vector<16xf32>
    %9 = vector.shape_cast %8 : vector<16xf32> to vector<16x1xf32>
    %cst_3 = arith.constant 3.200000e+01 : f32
    %10 = vector.broadcast %cst_3 : f32 to vector<16x1xf32>
    %11 = arith.divf %9, %10 : vector<16x1xf32>
    %cst_4 = arith.constant 9.99999974E-6 : f32
    %12 = vector.broadcast %cst_4 : f32 to vector<16x1xf32>
    %13 = arith.addf %11, %12 : vector<16x1xf32>
    %14 = math.rsqrt %13 : vector<16x1xf32>
    %15 = vector.broadcast %14 : vector<16x1xf32> to vector<16x32xf32>
    %16 = arith.mulf %6, %15 : vector<16x32xf32>
    %c0_5 = arith.constant 0 : index
    %c0_6 = arith.constant 0 : index
    %17 = vector.load %arg2[%c0_5, %c0_6] : memref<1x32xf32, #tpu.memory_space<vmem>>, vector<1x32xf32>
    %18 = vector.broadcast %17 : vector<1x32xf32> to vector<16x32xf32>
    %19 = arith.mulf %16, %18 : vector<16x32xf32>
    %c0_7 = arith.constant 0 : index
    %c0_8 = arith.constant 0 : index
    %20 = vector.load %arg3[%c0_7, %c0_8] : memref<1x32xf32, #tpu.memory_space<vmem>>, vector<1x32xf32>
    %21 = vector.broadcast %20 : vector<1x32xf32> to vector<16x32xf32>
    %22 = arith.addf %19, %21 : vector<16x32xf32>
    %c0_9 = arith.constant 0 : index
    %c0_10 = arith.constant 0 : index
    %23 = vector.load %arg4[%c0_9, %c0_10] : memref<32x8xf32, #tpu.memory_space<vmem>>, vector<32x8xf32>
    %cst_11 = arith.constant dense<0.000000e+00> : vector<16x8xf32>
    %24 = tpu.matmul %22, %23, %cst_11 {dimension_numbers = #tpu.dot_dimension_numbers<[1], [0], [0], [1], [0, 0, 1, 1], [], []>} : vector<16x32xf32>, vector<32x8xf32>, vector<16x8xf32> -> vector<16x8xf32>
    %c0_12 = arith.constant 0 : index
    %c0_13 = arith.constant 0 : index
    %25 = vector.load %arg5[%c0_12, %c0_13] : memref<1x8xf32, #tpu.memory_space<vmem>>, vector<1x8xf32>
    %26 = vector.broadcast %25 : vector<1x8xf32> to vector<16x8xf32>
    %27 = arith.addf %24, %26 : vector<16x8xf32>
    %c0_14 = arith.constant 0 : index
    %c0_15 = arith.constant 0 : index
    %28 = vector.load %arg6[%c0_14, %c0_15] : memref<16x8xf32, #tpu.memory_space<vmem>>, vector<16x8xf32>
    tpu.vector_store %arg6[%c0_14, %c0_15], %27 {strides = array<i32>} : memref<16x8xf32, #tpu.memory_space<vmem>>, vector<16x8xf32>,
    return
  }
  func.func @transform_0(%arg0: i32) -> (i32, i32) {
    %c0_i32 = arith.constant 0 : i32
    %c0_i32_0 = arith.constant 0 : i32
    return %arg0, %c0_i32 : i32, i32
  }
  func.func @transform_1(%arg0: i32) -> (i32, i32) {
    %c0_i32 = arith.constant 0 : i32
    %c0_i32_0 = arith.constant 0 : i32
    %c0_i32_1 = arith.constant 0 : i32
    return %c0_i32, %c0_i32_0 : i32, i32
  }
  func.func @transform_2(%arg0: i32) -> (i32, i32) {
    %c0_i32 = arith.constant 0 : i32
    %c0_i32_0 = arith.constant 0 : i32
    %c0_i32_1 = arith.constant 0 : i32
    return %c0_i32, %c0_i32_0 : i32, i32
  }
  func.func @transform_3(%arg0: i32) -> (i32, i32) {
    %c0_i32 = arith.constant 0 : i32
    %c0_i32_0 = arith.constant 0 : i32
    %c0_i32_1 = arith.constant 0 : i32
    return %c0_i32, %c0_i32_0 : i32, i32
  }
  func.func @transform_4(%arg0: i32) -> (i32, i32) {
    %c0_i32 = arith.constant 0 : i32
    %c0_i32_0 = arith.constant 0 : i32
    %c0_i32_1 = arith.constant 0 : i32
    return %c0_i32, %c0_i32_0 : i32, i32
  }
  func.func @transform_5(%arg0: i32) -> (i32, i32) {
    %c0_i32 = arith.constant 0 : i32
    %c0_i32_0 = arith.constant 0 : i32
    return %arg0, %c0_i32 : i32, i32
  }
}

</mosaic_0001>

<llo_original>
// kernel: tpu_custom_call.1
$region0: #{tpu_custom_call.1}
  #allocation0 [shape = 'u32[]', space=smem, size = 0x4, offset = 0x4, fixed_abs, tag = 'smem constant byte address 0x4 - core index']
  #allocation1 [shape = 'u32[144,128]{1,0:T(1,128)}', space=vmem, size = 0x12000, scoped, tag = 'internal scratch']
  %s0 = inlined_call_operand.vmem [shape: f32[16,32], index: 0, kind: input, shape index: {}]
  %s1 = inlined_call_operand.vmem [shape: f32[1,32], index: 1, kind: input, shape index: {}]
  %s2 = inlined_call_operand.vmem [shape: f32[1,32], index: 2, kind: input, shape index: {}]
  %s3 = inlined_call_operand.vmem [shape: f32[32,8], index: 3, kind: input, shape index: {}]
  %s4 = inlined_call_operand.vmem [shape: f32[1,8], index: 4, kind: input, shape index: {}]
  %s5 = inlined_call_operand.vmem [shape: f32[16,8], index: 5, kind: output, shape index: {}]
  %s6 = sld [smem:[#allocation0]]
  $region30: #{tpu_custom_call.1} parent=0
    _
  %s8 = ssub.s32 1, %s6
  %s9 = scalar_select 0, %s8, %s6
  // Predicated region
  $region2: #{tpu_custom_call.1} parent=0 // pred_check
    _
  $region3: #{tpu_custom_call.1} parent=0 // pred_check_branch
    %11 = sbr.rel (0) target = $region5
  $region4: #{tpu_custom_call.1} parent=0 // pred_region
    _
  $region5: #{tpu_custom_call.1} parent=0 // pred_fallthru
    _
  // Predicated region
  $region6: #{tpu_custom_call.1} parent=0 // pred_check
    _
  $region7: #{tpu_custom_call.1} parent=0 // pred_check_branch
    %13 = sbr.rel (0) target = $region9
  $region8: #{tpu_custom_call.1} parent=0 // pred_region
    _
  $region9: #{tpu_custom_call.1} parent=0 // pred_fallthru
    _
  // Predicated region
  $region10: #{tpu_custom_call.1} parent=0 // pred_check
    _
  $region11: #{tpu_custom_call.1} parent=0 // pred_check_branch
    %15 = sbr.rel (0) target = $region13
  $region12: #{tpu_custom_call.1} parent=0 // pred_region
    _
  $region13: #{tpu_custom_call.1} parent=0 // pred_fallthru
    _
  // Predicated region
  $region14: #{tpu_custom_call.1} parent=0 // pred_check
    _
  $region15: #{tpu_custom_call.1} parent=0 // pred_check_branch
    %17 = sbr.rel (0) target = $region17
  $region16: #{tpu_custom_call.1} parent=0 // pred_region
    _
  $region17: #{tpu_custom_call.1} parent=0 // pred_fallthru
    _
  // Predicated region
  $region18: #{tpu_custom_call.1} parent=0 // pred_check
    _
  $region19: #{tpu_custom_call.1} parent=0 // pred_check_branch
    %19 = sbr.rel (0) target = $region21
  $region20: #{tpu_custom_call.1} parent=0 // pred_region
    _
  $region21: #{tpu_custom_call.1} parent=0 // pred_fallthru
    _
  %v20 = vld [vmem:[%s0] sm:$0xff]
  %v21 = vld [vmem:[%s0 + $0x8] sm:$0xff]
  %vm22 = vcmask 261120
  %v23 = vsel %vm22, %v20, 0.0
  %24 = vadd.xlane.f32.xlu0 %v23
  %v25 = vpop.xlane.xlu0 %24
  %v26 = vsel %vm22, %v21, 0.0
  %27 = vadd.xlane.f32.xlu0 %v26
  %v28 = vpop.xlane.xlu0 %27
  %v29 = vrcp.pop 32.0
  %v30 = vmul.f32 %v25, %v29
  %v31 = vmul.f32 %v28, %v29
  %v32 = vsub.f32 %v20, %v30
  %v33 = vsub.f32 %v21, %v31
  %v34 = vmul.f32 %v32, %v32
  %v35 = vmul.f32 %v33, %v33
  %v36 = vsel %vm22, %v34, 0.0
  %37 = vadd.xlane.f32.xlu0 %v36
  %v38 = vpop.xlane.xlu0 %37
  %v39 = vsel %vm22, %v35, 0.0
  %40 = vadd.xlane.f32.xlu0 %v39
  %v41 = vpop.xlane.xlu0 %40
  %v42 = vmul.f32 %v38, %v29
  %v43 = vmul.f32 %v41, %v29
  %v44 = vadd.f32 %v42, 1e-05
  %v45 = vadd.f32 %v43, 1e-05
  %v46 = vrsqrt.pop %v44
  %v47 = vrsqrt.pop %v45
  %v48 = vmul.f32 %v32, %v46
  %v49 = vmul.f32 %v33, %v47
  %v50 = vld [vmem:[%s1] sm:$0x1]
  %v52 = vlaneseq
  %v53 = vshrl.u32 %v52, 7
  %v54 = vsub.s32 0, %v53
  %v55 = vrot.slane %v50, %v54
  %v57 = vmul.f32 %v48, %v55
  %v58 = vmul.f32 %v49, %v55
  %v59 = vld [vmem:[%s2] sm:$0x1]
  %v61 = vlaneseq
  %v62 = vshrl.u32 %v61, 7
  %v63 = vsub.s32 0, %v62
  %v64 = vrot.slane %v59, %v63
  %v66 = vadd.f32 %v57, %v64
  %v67 = vadd.f32 %v58, %v64
  %v68 = vld [vmem:[%s3] sm:$0xff]
  %v69 = vld [vmem:[%s3 + $0x8] sm:$0xff]
  %v70 = vld [vmem:[%s3 + $0x10] sm:$0xff]
  %v71 = vld [vmem:[%s3 + $0x18] sm:$0xff]
  %v72 = vld [vmem:[%s4] sm:$0x1]
  %v74 = vlaneseq
  %v75 = vshrl.u32 %v74, 7
  %v76 = vsub.s32 0, %v75
  %v77 = vrot.slane %v72, %v76
  %v80 = vsel %vm22, %v66, 0
  %v83 = vsel %vm22, %v67, 0
  %85 = vmatprep.subr.mxu0 0.0
  %86 = vmatpush1.msra.mxu0 0.0
  %87 = vmatprep.subr.mxu0 0.0
  %88 = vmatpush1.msra.mxu0 0.0
  %89 = vmatprep.subr.mxu0 0.0
  %90 = vmatpush1.msra.mxu0 0.0
  %91 = vmatprep.subr.mxu0 0.0
  %92 = vmatpush1.msra.mxu0 0.0
  %93 = vmatprep.subr.mxu0 0.0
  %94 = vmatpush1.msra.mxu0 0.0
  %95 = vmatprep.subr.mxu0 0.0
  %96 = vmatpush1.msra.mxu0 0.0
  %97 = vmatprep.subr.mxu0 0.0
  %98 = vmatpush1.msra.mxu0 0.0
  %99 = vmatprep.subr.mxu0 0.0
  %100 = vmatpush1.msra.mxu0 0.0
  %101 = vmatprep.subr.mxu0 0.0
  %102 = vmatpush1.msra.mxu0 0.0
  %103 = vmatprep.subr.mxu0 0.0
  %104 = vmatpush1.msra.mxu0 0.0
  %105 = vmatprep.subr.mxu0 0.0
  %106 = vmatpush1.msra.mxu0 0.0
  %107 = vmatprep.subr.mxu0 0.0
  %108 = vmatpush1.msra.mxu0 0.0
  %109 = vmatprep.subr.mxu0 0.0
  %110 = vmatpush1.msra.mxu0 %v71
  %111 = vmatprep.subr.mxu0 0.0
  %112 = vmatpush1.msra.mxu0 %v70
  %113 = vmatprep.subr.mxu0 0.0
  %114 = vmatpush1.msra.mxu0 %v69
  %115 = vmatprep.subr.mxu0 0.0
  %116 = vmatpush1.msra.mxu0 %v68
  %117 = vmatprep.subr.mxu0 0.0
  %118 = vmatpush2.msra.mxu0 0.0
  %119 = vmatprep.subr.mxu0 0.0
  %120 = vmatpush2.msra.mxu0 0.0
  %121 = vmatprep.subr.mxu0 0.0
  %122 = vmatpush2.msra.mxu0 0.0
  %123 = vmatprep.subr.mxu0 0.0
  %124 = vmatpush2.msra.mxu0 0.0
  %125 = vmatprep.subr.mxu0 0.0
  %126 = vmatpush2.msra.mxu0 0.0
  %127 = vmatprep.subr.mxu0 0.0
  %128 = vmatpush2.msra.mxu0 0.0
  %129 = vmatprep.subr.mxu0 0.0
  %130 = vmatpush2.msra.mxu0 0.0
  %131 = vmatprep.subr.mxu0 0.0
  %132 = vmatpush2.msra.mxu0 0.0
  %133 = vmatprep.subr.mxu0 0.0
  %134 = vmatpush2.msra.mxu0 0.0
  %135 = vmatprep.subr.mxu0 0.0
  %136 = vmatpush2.msra.mxu0 0.0
  %137 = vmatprep.subr.mxu0 0.0
  %138 = vmatpush2.msra.mxu0 0.0
  %139 = vmatprep.subr.mxu0 0.0
  %140 = vmatpush2.msra.mxu0 0.0
  %141 = vmatprep.subr.mxu0 0.0
  %142 = vmatpush2.msra.mxu0 0.0
  %143 = vmatprep.subr.mxu0 0.0
  %144 = vmatpush2.msra.mxu0 0.0
  %145 = vmatprep.subr.mxu0 0.0
  %146 = vmatpush2.msra.mxu0 0.0
  %147 = vmatprep.subr.mxu0 0.0
  %148 = vmatpush2.msra.mxu0 0.0
  %149 = vmatprep.mubr.f32.mxu0 0.0
  %150 = vmatmul.mubr.f32.gmra.mxu0 %v80
  %v151 = vpop.f32.mrf.mxu0
  %v152 = vadd.f32 %v77, %v151
  %v153 = vpop.f32.mrf.mxu0
  %154 = vmatprep.mubr.f32.mxu0 0.0
  %155 = vmatmul.mubr.f32.gmra.mxu0 %v83
  %v156 = vpop.f32.mrf.mxu0
  %v157 = vadd.f32 %v77, %v156
  %v158 = vpop.f32.mrf.mxu0
  %159 = vdwg.mxu0
  %vm160 = vcmask 64512
  %161 = vst.msk [vmem:[%s5] sm:$0xff] %vm160, %v152
  %162 = vst.msk [vmem:[%s5 + $0x8] sm:$0xff] %vm160, %v157
  // Predicated region
  $region22: #{tpu_custom_call.1} parent=0 // pred_check
    _
  $region23: #{tpu_custom_call.1} parent=0 // pred_check_branch
    %164 = sbr.rel (0) target = $region25
  $region24: #{tpu_custom_call.1} parent=0 // pred_region
    _
  $region25: #{tpu_custom_call.1} parent=0 // pred_fallthru
    _
  // Predicated region
  $region26: #{tpu_custom_call.1} parent=0 // pred_check
    _
  $region27: #{tpu_custom_call.1} parent=0 // pred_check_branch
    %166 = sbr.rel (0) target = $region29
  $region28: #{tpu_custom_call.1} parent=0 // pred_region
    _
  $region29: #{tpu_custom_call.1} parent=0 // pred_fallthru
    _

</llo_original>
